<compile_context>
chip_gen: v7x
topology: tpu7x:2x2x1
jax: 0.10.0
libtpu: 0.0.40
codegen_flags: <defaults>
</compile_context>

<pallas_src>
import jax
import jax.numpy as jnp
from jax.experimental import pallas as pl
from jax.experimental.pallas import tpu as pltpu


# ----------------------------------------------------------------------------
# Kernel
# ----------------------------------------------------------------------------
def _attn_tile(q, k, v, m):
    """Per-tile attention math shared by both kernel variants.

    q: [Bt, Lq, D], k/v: [Bt, tk, D], m: [Bt, Lq, tk] bool (True = masked).
    Returns (attn_f32 [Bt, Lq, tk], ctx_partial_f32 [Bt, Lq, D]).
    """
    scale = 1.0 / (q.shape[-1] ** 0.5)
    # Q @ K^T as a contraction over D: MXU consumes the transposed RHS
    # natively, no materialized transpose / relayout.
    scores = jnp.einsum("bqd,bkd->bqk", q, k,
                        preferred_element_type=jnp.float32) * scale
    scores = jnp.where(m, jnp.float32(-1e9), scores)

    # Softmax over the QUERY axis (axis 1 of the tile).  Key columns are
    # independent, so tiling along Lk needs no rescaling; full Lq is resident.
    smax = jnp.max(scores, axis=1, keepdims=True)
    e = jnp.exp(scores - smax)
    denom = jnp.sum(e, axis=1, keepdims=True)
    # Exact divide keeps softmax bit-tight (1e-5 tolerance downstream).
    # pl.reciprocal(..., approx=True) would offload to the EUP but loosens
    # the tolerance to ~1e-3.
    attn = e * pl.reciprocal(denom, approx=False)

    ctx_part = jnp.einsum("bqk,bkd->bqd", attn.astype(v.dtype), v,
                          preferred_element_type=jnp.float32)
    return attn, ctx_part


def _sdpa_kernel_direct(q_ref, k_ref, v_ref, m_ref, ctx_ref, attn_ref):
    """f32 ctx: accumulate straight into the resident output block."""
    kidx = pl.program_id(1)
    attn, ctx_part = _attn_tile(q_ref[...], k_ref[...], v_ref[...], m_ref[...])
    attn_ref[...] = attn.astype(attn_ref.dtype)

    @pl.when(kidx == 0)
    def _():
        ctx_ref[...] = ctx_part

    @pl.when(kidx > 0)
    def _():
        ctx_ref[...] += ctx_part


def _sdpa_kernel_scratch(q_ref, k_ref, v_ref, m_ref, ctx_ref, attn_ref, acc_ref):
    """Low-precision ctx: accumulate in f32 scratch, cast once at the end."""
    kidx = pl.program_id(1)
    attn, ctx_part = _attn_tile(q_ref[...], k_ref[...], v_ref[...], m_ref[...])
    attn_ref[...] = attn.astype(attn_ref.dtype)

    @pl.when(kidx == 0)
    def _():
        acc_ref[...] = ctx_part

    @pl.when(kidx > 0)
    def _():
        acc_ref[...] += ctx_part

    @pl.when(kidx == pl.num_programs(1) - 1)
    def _():
        ctx_ref[...] = acc_ref[...].astype(ctx_ref.dtype)


# ----------------------------------------------------------------------------
# Generation-aware tiling
# ----------------------------------------------------------------------------
def _vmem_budgets():
    """(planning budget, vmem_limit_bytes) derived from the chip's VMEM."""
    phys = 64 * 1024 * 1024                      # conservative default (v7x)
    try:
        phys = int(pltpu.get_tpu_info().vmem_capacity_bytes)
    except Exception:
        pass
    plan = max(16 * 1024 * 1024, min(phys // 2, 80 * 1024 * 1024))
    limit = max(32 * 1024 * 1024, min((phys * 3) // 4, 112 * 1024 * 1024))
    return plan, limit


def _choose_tiles(B, Lq, Lk, D, itemsize, plan_bytes):
    """Pick (batch tile, padded Lk, key tile) within the VMEM budget."""
    # --- key axis: lane-dense tiles (multiples of 128) once Lk > 128 -------
    if Lk <= 128:
        Lk_p, tk_cands = Lk, (Lk,)               # block == full dim: legal
    else:
        Lk_p = ((Lk + 127) // 128) * 128
        big = plan_bytes >= 48 * 1024 * 1024     # v5e / v6e sized budget
        cands = (1024, 512, 384, 256, 128) if big else (512, 384, 256, 128)
        tk_cands = tuple(c for c in cands if Lk_p % c == 0) or (128,)

    def per_batch_bytes(tk):
        return (2 * (2 * tk * D * itemsize       # K, V tiles (double-buffered)
                     + Lq * tk * 1               # bool mask tile
                     + Lq * tk * 4)              # f32 attn output tile
                + Lq * D * itemsize              # Q (resident across k)
                + Lq * D * 4                     # ctx accumulator / output (f32)
                + 3 * Lq * tk * 4)               # scores / exp / attn live values

    # Shrink tk before Bt if even Bt=1 would overflow the budget (v7x rule).
    tk = tk_cands[0]
    for cand in tk_cands:
        tk = cand
        if per_batch_bytes(cand) <= plan_bytes:
            break

    Bt = max(1, min(B, plan_bytes // max(per_batch_bytes(tk), 1)))
    # Keep >= 2 iterations on the "parallel" batch axis so both v7x
    # TensorCores are used; harmless one extra step on single-TC chips.
    if B >= 2:
        Bt = min(Bt, max(1, B // 2))
    while B % Bt:
        Bt -= 1
    return Bt, Lk_p, tk


# ----------------------------------------------------------------------------
# Wrapper
# ----------------------------------------------------------------------------
def scaled_dot_product_attention(Q, K, V, attn_mask, attn_dtype=jnp.float32):
    """Q: [B, Lq, D], K/V: [B, Lk, D], attn_mask: [B, Lq, Lk] (bool, True=mask).

    Returns (context [B, Lq, D] in Q's dtype, attn [B, Lq, Lk] in attn_dtype),
    matching the PyTorch module (softmax over dim=1, the query axis).
    """
    B, Lq, D = Q.shape
    Lk = K.shape[1]

    # Bool is already 1 byte in XLA — no int8 materialisation pass.
    if attn_mask.dtype != jnp.bool_:
        attn_mask = attn_mask != 0

    itemsize = jnp.dtype(Q.dtype).itemsize
    plan_bytes, vmem_limit = _vmem_budgets()
    Bt, Lk_p, tk = _choose_tiles(B, Lq, Lk, D, itemsize, plan_bytes)

    if Lk_p != Lk:
        pad = Lk_p - Lk
        K = jnp.pad(K, ((0, 0), (0, pad), (0, 0)))          # zero V/K rows
        V = jnp.pad(V, ((0, 0), (0, pad), (0, 0)))          # -> 0 ctx contribution
        attn_mask = jnp.pad(attn_mask, ((0, 0), (0, 0), (0, pad)),
                            constant_values=True)           # padded keys masked

    nk = Lk_p // tk
    grid = (B // Bt, nk)

    # Deeper buffering on streamed inputs only when the key loop is long
    # enough to expose DMA latency (and the budget has room for it).
    deep = nk >= 3 and plan_bytes >= 48 * 1024 * 1024

    def _stream_spec(shape, index_map):
        if deep:
            return pl.BlockSpec(shape, index_map, pipeline_mode=pl.Buffered(3))
        return pl.BlockSpec(shape, index_map)

    ctx_is_f32 = jnp.dtype(Q.dtype) == jnp.float32
    kernel = _sdpa_kernel_direct if ctx_is_f32 else _sdpa_kernel_scratch
    scratch = [] if ctx_is_f32 else [pltpu.VMEM((Bt, Lq, D), jnp.float32)]

    in_specs = [
        pl.BlockSpec((Bt, Lq, D), lambda b, k: (b, 0, 0)),            # Q resident
        _stream_spec((Bt, tk, D), lambda b, k: (b, k, 0)),            # K tile
        _stream_spec((Bt, tk, D), lambda b, k: (b, k, 0)),            # V tile
        _stream_spec((Bt, Lq, tk), lambda b, k: (b, 0, k)),           # mask tile
    ]
    out_specs = (
        pl.BlockSpec((Bt, Lq, D), lambda b, k: (b, 0, 0)),            # ctx (resident)
        pl.BlockSpec((Bt, Lq, tk), lambda b, k: (b, 0, k)),           # attn tile
    )
    # TODO(synk): lane-dense (B, Lq*D) ctx layout for D < 128 writeback-bound cases.

    ctx, attn = pl.pallas_call(
        kernel,
        out_shape=(
            jax.ShapeDtypeStruct((B, Lq, D), Q.dtype),
            jax.ShapeDtypeStruct((B, Lq, Lk_p), attn_dtype),
        ),
        grid=grid,
        in_specs=in_specs,
        out_specs=out_specs,
        scratch_shapes=scratch,
        compiler_params=pltpu.CompilerParams(
            dimension_semantics=("parallel", "arbitrary"),
            vmem_limit_bytes=vmem_limit,
        ),
    )(Q, K, V, attn_mask)

    if Lk_p != Lk:
        attn = attn[:, :, :Lk]
    return ctx, attn


# ----------------------------------------------------------------------------
# Reference + test
# ----------------------------------------------------------------------------
def _reference(Q, K, V, attn_mask):
    d_k = Q.shape[-1]
    scores = jnp.einsum("bqd,bkd->bqk", Q, K) / jnp.sqrt(jnp.float32(d_k))
    scores = jnp.where(attn_mask, -1e9, scores)
    attn = jax.nn.softmax(scores, axis=1)      # dim=1, matching the PyTorch code
    ctx = jnp.einsum("bqk,bkd->bqd", attn, V)
    return ctx, attn


if __name__ == "__main__":
    key = jax.random.PRNGKey(0)
    kq, kk, kv, km = jax.random.split(key, 4)

    B, Lq, Lk, D = 2, 8, 8, 32
    Q = jax.random.normal(kq, (B, Lq, D), dtype=jnp.float32)
    K = jax.random.normal(kk, (B, Lk, D), dtype=jnp.float32)
    V = jax.random.normal(kv, (B, Lk, D), dtype=jnp.float32)
    attn_mask = jax.random.uniform(km, (B, Lq, Lk)) < 0.25   # boolean mask

    ctx, attn = scaled_dot_product_attention(Q, K, V, attn_mask)
    jax.block_until_ready((ctx, attn))

    ctx_ref, attn_ref = _reference(Q, K, V, attn_mask)
    assert ctx.shape == ctx_ref.shape and attn.shape == attn_ref.shape
    assert jnp.allclose(ctx, ctx_ref, atol=1e-4, rtol=1e-4)
    assert jnp.allclose(attn, attn_ref, atol=1e-5, rtol=1e-5)

    print("KERNEL_OK")
</pallas_src>

<mosaic_0001>
module attributes {stable_mosaic.version = 11 : i64} {
  func.func @_sdpa_kernel_direct(%arg0: i32, %arg1: i32, %arg2: memref<1x8x32xf32, #tpu.memory_space<vmem>>, %arg3: memref<1x8x32xf32, #tpu.memory_space<vmem>>, %arg4: memref<1x8x32xf32, #tpu.memory_space<vmem>>, %arg5: memref<1x8x8xi32, #tpu.memory_space<vmem>>, %arg6: memref<1x8x32xf32, #tpu.memory_space<vmem>>, %arg7: memref<1x8x8xf32, #tpu.memory_space<vmem>>) attributes {dimension_semantics = [#tpu.dimension_semantics<parallel>, #tpu.dimension_semantics<arbitrary>], iteration_bounds = array<i64: 2, 1>, scalar_prefetch = 0 : i64, scratch_operands = 0 : i64, tpu.core_type = #tpu.core_type<tc>, window_params = [{transform_indices = @transform_0, window_bounds = array<i64: 1, 8, 32>}, {transform_indices = @transform_1, window_bounds = array<i64: 1, 8, 32>}, {transform_indices = @transform_2, window_bounds = array<i64: 1, 8, 32>}, {transform_indices = @transform_3, window_bounds = array<i64: 1, 8, 8>}, {transform_indices = @transform_4, window_bounds = array<i64: 1, 8, 32>}, {transform_indices = @transform_5, window_bounds = array<i64: 1, 8, 8>}]} {
    %c0 = arith.constant 0 : index
    %c0_0 = arith.constant 0 : index
    %c0_1 = arith.constant 0 : index
    %0 = vector.load %arg2[%c0, %c0_0, %c0_1] : memref<1x8x32xf32, #tpu.memory_space<vmem>>, vector<1x8x32xf32>
    %c0_2 = arith.constant 0 : index
    %c0_3 = arith.constant 0 : index
    %c0_4 = arith.constant 0 : index
    %1 = vector.load %arg3[%c0_2, %c0_3, %c0_4] : memref<1x8x32xf32, #tpu.memory_space<vmem>>, vector<1x8x32xf32>
    %c0_5 = arith.constant 0 : index
    %c0_6 = arith.constant 0 : index
    %c0_7 = arith.constant 0 : index
    %2 = vector.load %arg4[%c0_5, %c0_6, %c0_7] : memref<1x8x32xf32, #tpu.memory_space<vmem>>, vector<1x8x32xf32>
    %c0_8 = arith.constant 0 : index
    %c0_9 = arith.constant 0 : index
    %c0_10 = arith.constant 0 : index
    %3 = vector.load %arg5[%c0_8, %c0_9, %c0_10] : memref<1x8x8xi32, #tpu.memory_space<vmem>>, vector<1x8x8xi32>
    %cst = arith.constant dense<0> : vector<1x8x8xi32>
    %4 = arith.cmpi ne, %3, %cst : vector<1x8x8xi32>
    "tpu.trace_start"() <{level = 10 : i32, message = "bqd,bkd->bqk"}> : () -> ()
    %cst_11 = arith.constant dense<0.000000e+00> : vector<1x8x8xf32>
    %5 = tpu.matmul %0, %1, %cst_11 {dimension_numbers = #tpu.dot_dimension_numbers<[2], [2], [1], [1], [0, 0, 0, 1, 1, 1], [0], [0]>} : vector<1x8x32xf32>, vector<1x8x32xf32>, vector<1x8x8xf32> -> vector<1x8x8xf32>
    "tpu.trace_stop"() : () -> ()
    %cst_12 = arith.constant 0.176776692 : f32
    %6 = vector.broadcast %cst_12 : f32 to vector<1x8x8xf32>
    %7 = arith.mulf %5, %6 : vector<1x8x8xf32>
    %cst_13 = arith.constant -1.000000e+09 : f32
    %8 = vector.broadcast %cst_13 : f32 to vector<1x8x8xf32>
    %9 = arith.select %4, %8, %7 : vector<1x8x8xi1>, vector<1x8x8xf32>
    %cst_14 = arith.constant dense<0xFF800000> : vector<1x8xf32>
    %10 = vector.multi_reduction <maximumf>, %9, %cst_14 [1] : vector<1x8x8xf32> to vector<1x8xf32>
    %11 = vector.shape_cast %10 : vector<1x8xf32> to vector<1x1x8xf32>
    %12 = vector.broadcast %11 : vector<1x1x8xf32> to vector<1x8x8xf32>
    %13 = arith.subf %9, %12 : vector<1x8x8xf32>
    %14 = math.exp %13 : vector<1x8x8xf32>
    %cst_15 = arith.constant dense<0.000000e+00> : vector<1x8xf32>
    %15 = vector.multi_reduction <add>, %14, %cst_15 [1] : vector<1x8x8xf32> to vector<1x8xf32>
    %16 = vector.shape_cast %15 : vector<1x8xf32> to vector<1x1x8xf32>
    %17 = tpu.reciprocal %16 : vector<1x1x8xf32> -> vector<1x1x8xf32>
    %18 = vector.broadcast %17 : vector<1x1x8xf32> to vector<1x8x8xf32>
    %19 = arith.mulf %14, %18 : vector<1x8x8xf32>
    "tpu.trace_start"() <{level = 10 : i32, message = "bqk,bkd->bqd"}> : () -> ()
    %cst_16 = arith.constant dense<0.000000e+00> : vector<1x8x32xf32>
    %20 = tpu.matmul %19, %2, %cst_16 {dimension_numbers = #tpu.dot_dimension_numbers<[2], [1], [1], [2], [0, 0, 0, 1, 1, 2], [0], [0]>} : vector<1x8x8xf32>, vector<1x8x32xf32>, vector<1x8x32xf32> -> vector<1x8x32xf32>
    "tpu.trace_stop"() : () -> ()
    %c0_17 = arith.constant 0 : index
    %c0_18 = arith.constant 0 : index
    %c0_19 = arith.constant 0 : index
    %21 = vector.load %arg7[%c0_17, %c0_18, %c0_19] : memref<1x8x8xf32, #tpu.memory_space<vmem>>, vector<1x8x8xf32>
    tpu.vector_store %arg7[%c0_17, %c0_18, %c0_19], %19 {strides = array<i32>} : memref<1x8x8xf32, #tpu.memory_space<vmem>>, vector<1x8x8xf32>,
    %c0_i32 = arith.constant 0 : i32
    %22 = arith.cmpi eq, %arg1, %c0_i32 : i32
    %23 = arith.extui %22 : i1 to i32
    %c0_i32_20 = arith.constant 0 : i32
    %24 = arith.cmpi ne, %23, %c0_i32_20 : i32
    scf.if %24 {
      %c0_23 = arith.constant 0 : index
      %c0_24 = arith.constant 0 : index
      %c0_25 = arith.constant 0 : index
      %28 = vector.load %arg6[%c0_23, %c0_24, %c0_25] : memref<1x8x32xf32, #tpu.memory_space<vmem>>, vector<1x8x32xf32>
      tpu.vector_store %arg6[%c0_23, %c0_24, %c0_25], %20 {strides = array<i32>} : memref<1x8x32xf32, #tpu.memory_space<vmem>>, vector<1x8x32xf32>,
    } else {
    }
    %c0_i32_21 = arith.constant 0 : i32
    %25 = arith.cmpi sgt, %arg1, %c0_i32_21 : i32
    %26 = arith.extui %25 : i1 to i32
    %c0_i32_22 = arith.constant 0 : i32
    %27 = arith.cmpi ne, %26, %c0_i32_22 : i32
    scf.if %27 {
      %c0_23 = arith.constant 0 : index
      %c0_24 = arith.constant 0 : index
      %c0_25 = arith.constant 0 : index
      %28 = vector.load %arg6[%c0_23, %c0_24, %c0_25] : memref<1x8x32xf32, #tpu.memory_space<vmem>>, vector<1x8x32xf32>
      %29 = arith.addf %28, %20 : vector<1x8x32xf32>
      %c0_26 = arith.constant 0 : index
      %c0_27 = arith.constant 0 : index
      %c0_28 = arith.constant 0 : index
      %30 = vector.load %arg6[%c0_26, %c0_27, %c0_28] : memref<1x8x32xf32, #tpu.memory_space<vmem>>, vector<1x8x32xf32>
      tpu.vector_store %arg6[%c0_26, %c0_27, %c0_28], %29 {strides = array<i32>} : memref<1x8x32xf32, #tpu.memory_space<vmem>>, vector<1x8x32xf32>,
    } else {
    }
    return
  }
  func.func @transform_0(%arg0: i32, %arg1: i32) -> (i32, i32, i32) {
    %c0_i32 = arith.constant 0 : i32
    %c0_i32_0 = arith.constant 0 : i32
    %c0_i32_1 = arith.constant 0 : i32
    return %arg0, %c0_i32, %c0_i32_0 : i32, i32, i32
  }
  func.func @transform_1(%arg0: i32, %arg1: i32) -> (i32, i32, i32) {
    %c0_i32 = arith.constant 0 : i32
    %c0_i32_0 = arith.constant 0 : i32
    return %arg0, %arg1, %c0_i32 : i32, i32, i32
  }
  func.func @transform_2(%arg0: i32, %arg1: i32) -> (i32, i32, i32) {
    %c0_i32 = arith.constant 0 : i32
    %c0_i32_0 = arith.constant 0 : i32
    return %arg0, %arg1, %c0_i32 : i32, i32, i32
  }
  func.func @transform_3(%arg0: i32, %arg1: i32) -> (i32, i32, i32) {
    %c0_i32 = arith.constant 0 : i32
    %c0_i32_0 = arith.constant 0 : i32
    return %arg0, %c0_i32, %arg1 : i32, i32, i32
  }
  func.func @transform_4(%arg0: i32, %arg1: i32) -> (i32, i32, i32) {
    %c0_i32 = arith.constant 0 : i32
    %c0_i32_0 = arith.constant 0 : i32
    %c0_i32_1 = arith.constant 0 : i32
    return %arg0, %c0_i32, %c0_i32_0 : i32, i32, i32
  }
  func.func @transform_5(%arg0: i32, %arg1: i32) -> (i32, i32, i32) {
    %c0_i32 = arith.constant 0 : i32
    %c0_i32_0 = arith.constant 0 : i32
    return %arg0, %c0_i32, %arg1 : i32, i32, i32
  }
}

</mosaic_0001>

<llo_original>
// kernel: tpu_custom_call.1
$region0: #{tpu_custom_call.1}
  #allocation0 [shape = 'u32[]', space=smem, size = 0x4, offset = 0x4, fixed_abs, tag = 'smem constant byte address 0x4 - core index']
  #allocation1 [shape = 'u32[144,128]{1,0:T(1,128)}', space=vmem, size = 0x12000, scoped, tag = 'internal scratch']
  %s0 = inlined_call_operand.vmem [shape: f32[2,8,32], index: 0, kind: input, shape index: {}]
  %s1 = inlined_call_operand.hbm [shape: f32[2,8,32], index: 1, kind: input, shape index: {}]
  %s2 = inlined_call_operand.hbm [shape: f32[2,8,32], index: 2, kind: input, shape index: {}]
  %s3 = inlined_call_operand.vmem [shape: s32[2,8,8], index: 3, kind: input, shape index: {}]
  %s4 = inlined_call_operand.hbm [shape: f32[2,8,32], index: 4, kind: output, shape index: {0}]
  %s5 = inlined_call_operand.hbm [shape: f32[2,8,8], index: 5, kind: output, shape index: {1}]
  %6 = xla_tuple %s4, %s5
  %s7 = sld [smem:[#allocation0]]
  $region73: #{tpu_custom_call.1} parent=0
    _
  %s9 = ssub.s32 1, %s7
  %s10 = scalar_select 0, %s9, %s7
  $region1: #{tpu_custom_call.1} parent=0
    #allocation2 [shape = 'u8[8192]{0}', space=vmem, size = 0x2000, scoped, tag = 'input window, operand 1']
    #allocation3 [shape = 's32[2]{0}', space=sflag, size = 0x8, scoped, tag = 'scoped memory for tpu_custom_call.1']
    #allocation4 [shape = 's32[2]{0}', space=sflag, size = 0x8, scoped, tag = 'scoped memory for tpu_custom_call.1']
    #allocation5 [shape = 'u8[8192]{0}', space=vmem, size = 0x2000, scoped, tag = 'input window, operand 2']
    #allocation6 [shape = 's32[2]{0}', space=sflag, size = 0x8, scoped, tag = 'scoped memory for tpu_custom_call.1']
    #allocation7 [shape = 'u8[8192]{0}', space=vmem, size = 0x2000, scoped, tag = 'output window, operand 0']
    #allocation8 [shape = 'u8[8192]{0}', space=vmem, size = 0x2000, scoped, tag = 'output window, operand 1']
    #allocation9 [shape = 's32[2]{0}', space=sflag, size = 0x8, scoped, tag = 'scoped memory for tpu_custom_call.1']
    %11 = vsyncpa [#allocation3], 0
    %s12 = scalar_lea.sflag [#allocation3], 1
    %13 = vsyncpa %s12, 0
    %14 = vsyncpa [#allocation6], 0
    %s15 = scalar_lea.sflag [#allocation6], 1
    %16 = vsyncpa %s15, 0
    %17 = vsyncpa [#allocation4], 0
    %s18 = scalar_lea.sflag [#allocation4], 1
    %19 = vsyncpa %s18, 0
    %20 = vsyncpa [#allocation9], 0
    %s21 = scalar_lea.sflag [#allocation9], 1
    %22 = vsyncpa %s21, 0
    loop: start=0, step=1, limit=4
    $region2: #{tpu_custom_call.1} parent=1 // loop_pre_header
      _
    $region3: #{tpu_custom_call.1} parent=1 // loop_header
      %s24 = sphi 0, %s28
      %p25 = scmp.ge.s32.totalorder %s24, 4
      %s31 = sphi 0, %s43
      %s32 = sphi 0, %s39
      %s33 = sphi 0, %s31
      %s34 = sphi 0, %s32
      %s35 = sphi 0, %s33
      %s36 = sphi 0, %s34
      %s46 = sphi 0, %s48
      %s49 = sphi 0, %s46
      %s50 = sphi 0, %s49
      %s66 = sphi 0, %s50
      %s74 = sphi 0, %s76
      %s77 = sphi 0, %s74
      %s78 = sphi 0, %s77
      %s94 = sphi 0, %s78
      %s102 = sphi 0, %s104
      %s105 = sphi 0, %s102
      %s106 = sphi 0, %s105
      %s122 = sphi 0, %s106
      %s130 = sphi 0, %s132
      %s133 = sphi 0, %s130
      %s134 = sphi 0, %s133
      %s150 = sphi 0, %s134
      %s156 = sphi 0, %s158
      %s159 = sphi 0, %s156
      %s160 = sphi 0, %s159
      %s176 = sphi 0, %s160
      %s184 = sphi 0, %s186
      %s187 = sphi 0, %s184
      %s188 = sphi 0, %s187
      %s204 = sphi 0, %s188
    $region4: #{tpu_custom_call.1} parent=1 // loop_header_branch
      %27 = sbr.rel (%p25) target = $region8
    $region5: #{tpu_custom_call.1} parent=1 // loop_body
      %s29 = ssub.s32 %s24, 1
      %s30 = ssub.s32 %s24, 2
      %s37 = sadd.s32 1, %s32
      %p38 = scmp.ge.s32.totalorder %s37, 1
      %s39 = scalar_select %p38, 0, %s37
      %s40 = sadd.s32 1, %s31
      %s41 = scalar_select %p38, %s40, %s31
      %p42 = scmp.ge.s32.totalorder %s41, 2
      %s43 = scalar_select %p42, 0, %s41
      %s44 = ssub.s32 %s31, %s43
      %p45 = scmp.eq.s32.totalorder %s44, 0
      %s47 = sadd.s32 %s46, 1
      %s48 = scalar_select %p45, %s46, %s47
      %p51 = pneg %p45
      %p52 = scmp.eq.s32.totalorder %s24, 1
      %p53 = por %p51, %p52
      %p54 = scmp.ne.s32.totalorder %s46, %s49
      %p55 = scmp.eq.s32.totalorder %s24, 0
      %p56 = por %p54, %p55
      %p57 = scmp.ne.s32.totalorder %s46, %s49
      %p58 = scmp.eq.s32.totalorder %s29, 1
      %p59 = por %p57, %p58
      %p60 = scmp.ne.s32.totalorder %s49, %s50
      %p61 = scmp.eq.s32.totalorder %s29, 0
      %p62 = por %p60, %p61
      %p63 = scmp.ne.s32.totalorder %s49, %s50
      %p64 = scmp.eq.s32.totalorder %s30, 1
      %p65 = por %p63, %p64
      %p67 = scmp.ne.s32.totalorder %s50, %s66
      %p68 = scmp.eq.s32.totalorder %s30, 0
      %p69 = por %p67, %p68
      %s70 = ssub.s32 %s31, %s43
      %s71 = ssub.s32 %s32, %s39
      %s72 = sor.u32 %s70, %s71
      %p73 = scmp.eq.s32.totalorder %s72, 0
      %s75 = sadd.s32 %s74, 1
      %s76 = scalar_select %p73, %s74, %s75
      %p79 = pneg %p73
      %p80 = scmp.eq.s32.totalorder %s24, 1
      %p81 = por %p79, %p80
      %p82 = scmp.ne.s32.totalorder %s74, %s77
      %p83 = scmp.eq.s32.totalorder %s24, 0
      %p84 = por %p82, %p83
      %p85 = scmp.ne.s32.totalorder %s74, %s77
      %p86 = scmp.eq.s32.totalorder %s29, 1
      %p87 = por %p85, %p86
      %p88 = scmp.ne.s32.totalorder %s77, %s78
      %p89 = scmp.eq.s32.totalorder %s29, 0
      %p90 = por %p88, %p89
      %p91 = scmp.ne.s32.totalorder %s77, %s78
      %p92 = scmp.eq.s32.totalorder %s30, 1
      %p93 = por %p91, %p92
      %p95 = scmp.ne.s32.totalorder %s78, %s94
      %p96 = scmp.eq.s32.totalorder %s30, 0
      %p97 = por %p95, %p96
      %s98 = ssub.s32 %s31, %s43
      %s99 = ssub.s32 %s32, %s39
      %s100 = sor.u32 %s98, %s99
      %p101 = scmp.eq.s32.totalorder %s100, 0
      %s103 = sadd.s32 %s102, 1
      %s104 = scalar_select %p101, %s102, %s103
      %p107 = pneg %p101
      %p108 = scmp.eq.s32.totalorder %s24, 1
      %p109 = por %p107, %p108
      %p110 = scmp.ne.s32.totalorder %s102, %s105
      %p111 = scmp.eq.s32.totalorder %s24, 0
      %p112 = por %p110, %p111
      %p113 = scmp.ne.s32.totalorder %s102, %s105
      %p114 = scmp.eq.s32.totalorder %s29, 1
      %p115 = por %p113, %p114
      %p116 = scmp.ne.s32.totalorder %s105, %s106
      %p117 = scmp.eq.s32.totalorder %s29, 0
      %p118 = por %p116, %p117
      %p119 = scmp.ne.s32.totalorder %s105, %s106
      %p120 = scmp.eq.s32.totalorder %s30, 1
      %p121 = por %p119, %p120
      %p123 = scmp.ne.s32.totalorder %s106, %s122
      %p124 = scmp.eq.s32.totalorder %s30, 0
      %p125 = por %p123, %p124
      %s126 = ssub.s32 %s31, %s43
      %s127 = ssub.s32 %s32, %s39
      %s128 = sor.u32 %s126, %s127
      %p129 = scmp.eq.s32.totalorder %s128, 0
      %s131 = sadd.s32 %s130, 1
      %s132 = scalar_select %p129, %s130, %s131
      %p135 = pneg %p129
      %p136 = scmp.eq.s32.totalorder %s24, 1
      %p137 = por %p135, %p136
      %p138 = scmp.ne.s32.totalorder %s130, %s133
      %p139 = scmp.eq.s32.totalorder %s24, 0
      %p140 = por %p138, %p139
      %p141 = scmp.ne.s32.totalorder %s130, %s133
      %p142 = scmp.eq.s32.totalorder %s29, 1
      %p143 = por %p141, %p142
      %p144 = scmp.ne.s32.totalorder %s133, %s134
      %p145 = scmp.eq.s32.totalorder %s29, 0
      %p146 = por %p144, %p145
      %p147 = scmp.ne.s32.totalorder %s133, %s134
      %p148 = scmp.eq.s32.totalorder %s30, 1
      %p149 = por %p147, %p148
      %p151 = scmp.ne.s32.totalorder %s134, %s150
      %p152 = scmp.eq.s32.totalorder %s30, 0
      %p153 = por %p151, %p152
      %s154 = ssub.s32 %s31, %s43
      %p155 = scmp.eq.s32.totalorder %s154, 0
      %s157 = sadd.s32 %s156, 1
      %s158 = scalar_select %p155, %s156, %s157
      %p161 = pneg %p155
      %p162 = scmp.eq.s32.totalorder %s24, 1
      %p163 = por %p161, %p162
      %p164 = scmp.ne.s32.totalorder %s156, %s159
      %p165 = scmp.eq.s32.totalorder %s24, 0
      %p166 = por %p164, %p165
      %p167 = scmp.ne.s32.totalorder %s156, %s159
      %p168 = scmp.eq.s32.totalorder %s29, 1
      %p169 = por %p167, %p168
      %p170 = scmp.ne.s32.totalorder %s159, %s160
      %p171 = scmp.eq.s32.totalorder %s29, 0
      %p172 = por %p170, %p171
      %p173 = scmp.ne.s32.totalorder %s159, %s160
      %p174 = scmp.eq.s32.totalorder %s30, 1
      %p175 = por %p173, %p174
      %p177 = scmp.ne.s32.totalorder %s160, %s176
      %p178 = scmp.eq.s32.totalorder %s30, 0
      %p179 = por %p177, %p178
      %s180 = ssub.s32 %s31, %s43
      %s181 = ssub.s32 %s32, %s39
      %s182 = sor.u32 %s180, %s181
      %p183 = scmp.eq.s32.totalorder %s182, 0
      %s185 = sadd.s32 %s184, 1
      %s186 = scalar_select %p183, %s184, %s185
      %p189 = pneg %p183
      %p190 = scmp.eq.s32.totalorder %s24, 1
      %p191 = por %p189, %p190
      %p192 = scmp.ne.s32.totalorder %s184, %s187
      %p193 = scmp.eq.s32.totalorder %s24, 0
      %p194 = por %p192, %p193
      %p195 = scmp.ne.s32.totalorder %s184, %s187
      %p196 = scmp.eq.s32.totalorder %s29, 1
      %p197 = por %p195, %p196
      %p198 = scmp.ne.s32.totalorder %s187, %s188
      %p199 = scmp.eq.s32.totalorder %s29, 0
      %p200 = por %p198, %p199
      %p201 = scmp.ne.s32.totalorder %s187, %s188
      %p202 = scmp.eq.s32.totalorder %s30, 1
      %p203 = por %p201, %p202
      %p205 = scmp.ne.s32.totalorder %s188, %s204
      %p206 = scmp.eq.s32.totalorder %s30, 0
      %p207 = por %p205, %p206
      %p208 = scmp.le.s32.totalorder 1, %s24
      %p209 = scmp.lt.s32.totalorder %s24, 3
      %p210 = pnand %p208, %p209
      %p211 = pneg %p210
      // Predicated region
      $region9: #{tpu_custom_call.1} parent=5 // pred_check
        _
      $region10: #{tpu_custom_call.1} parent=5 // pred_check_branch
        %213 = sbr.rel (%p210) target = $region12
      $region11: #{tpu_custom_call.1} parent=5 // pred_region
        %s214 = ssub.s32 %s24, 1
      $region12: #{tpu_custom_call.1} parent=5 // pred_fallthru
        _
      %p215 = scmp.lt.s32.totalorder %s24, 2
      // Predicated region
      $region13: #{tpu_custom_call.1} parent=5 // pred_check
        %p216 = pneg %p215
      $region14: #{tpu_custom_call.1} parent=5 // pred_check_branch
        %218 = sbr.rel (%p216) target = $region16
      $region15: #{tpu_custom_call.1} parent=5 // pred_region
        // Predicated region
        $region17: #{tpu_custom_call.1} parent=15 // pred_check
          %p219 = pneg %p56
        $region18: #{tpu_custom_call.1} parent=15 // pred_check_branch
          %221 = sbr.rel (%p219) target = $region20
        $region19: #{tpu_custom_call.1} parent=15 // pred_region
          %p222 = scmp.lt.s32.totalorder %s31, 1
          %s223 = scalar_select %p222, %s31, 1
          %s224 = smul.addr %s223, 8
          %s225 = scalar_lea.vmem %s0, %s224
        $region20: #{tpu_custom_call.1} parent=15 // pred_fallthru
          _
        // Predicated region
        $region21: #{tpu_custom_call.1} parent=15 // pred_check
          %p226 = pneg %p84
        $region22: #{tpu_custom_call.1} parent=15 // pred_check_branch
          %228 = sbr.rel (%p226) target = $region24
        $region23: #{tpu_custom_call.1} parent=15 // pred_region
          %s229 = sand.u32 %s74, 1
          %s230 = scalar_lea.sflag [#allocation3], %s229
          %s231 = sand.u32 %s74, 1
          %s232 = smul.addr %s231, 8
          %s233 = scalar_lea.vmem [#allocation2], %s232
          %s235 = ssub.s32 128, 128
          %236 = vsyncadd %s230, %s235
          %s237 = sadd.s32 %s32, %s31
          %s238 = smul.addr %s237, 128
          %s239 = scalar_lea.hbm %s1, %s238
          %s241 = sshll.u32 %s233, 4
          %s242 = int_to_ptr.vmem [resolvable:$true] %s241
          %244 = dma.hbm_to_vmem [thread:$0]  %s239, 128, %s242, %s230
        $region24: #{tpu_custom_call.1} parent=15 // pred_fallthru
          _
        // Predicated region
        $region25: #{tpu_custom_call.1} parent=15 // pred_check
          %p245 = pneg %p112
        $region26: #{tpu_custom_call.1} parent=15 // pred_check_branch
          %247 = sbr.rel (%p245) target = $region28
        $region27: #{tpu_custom_call.1} parent=15 // pred_region
          %s248 = sand.u32 %s102, 1
          %s249 = scalar_lea.sflag [#allocation6], %s248
          %s250 = sand.u32 %s102, 1
          %s251 = smul.addr %s250, 8
          %s252 = scalar_lea.vmem [#allocation5], %s251
          %s254 = ssub.s32 128, 128
          %255 = vsyncadd %s249, %s254
          %s256 = sadd.s32 %s32, %s31
          %s257 = smul.addr %s256, 128
          %s258 = scalar_lea.hbm %s2, %s257
          %s260 = sshll.u32 %s252, 4
          %s261 = int_to_ptr.vmem [resolvable:$true] %s260
          %263 = dma.hbm_to_vmem [thread:$0]  %s258, 128, %s261, %s249
        $region28: #{tpu_custom_call.1} parent=15 // pred_fallthru
          _
        // Predicated region
        $region29: #{tpu_custom_call.1} parent=15 // pred_check
          %p264 = pneg %p140
        $region30: #{tpu_custom_call.1} parent=15 // pred_check_branch
          %266 = sbr.rel (%p264) target = $region32
        $region31: #{tpu_custom_call.1} parent=15 // pred_region
          %p267 = scmp.lt.s32.totalorder %s31, 1
          %s268 = scalar_select %p267, %s31, 1
          %p269 = scmp.lt.s32.totalorder %s32, 0
          %s270 = scalar_select %p269, %s32, 0
          %s271 = sadd.s32 %s270, %s268
          %s272 = smul.addr %s271, 8
          %s273 = scalar_lea.vmem %s3, %s272
        $region32: #{tpu_custom_call.1} parent=15 // pred_fallthru
          _
      $region16: #{tpu_custom_call.1} parent=5 // pred_fallthru
        _
      %p274 = scmp.le.s32.totalorder 1, %s24
      %p275 = scmp.lt.s32.totalorder %s24, 3
      %p276 = pnand %p274, %p275
      %p277 = pneg %p276
      // Predicated region
      $region33: #{tpu_custom_call.1} parent=5 // pred_check
        _
      $region34: #{tpu_custom_call.1} parent=5 // pred_check_branch
        %279 = sbr.rel (%p276) target = $region36
      $region35: #{tpu_custom_call.1} parent=5 // pred_region
        %s280 = ssub.s32 %s24, 1
        %s281 = sand.u32 %s77, 1
        %s282 = scalar_lea.sflag [#allocation3], %s281
        %s283 = sand.u32 %s77, 1
        %s284 = smul.addr %s283, 8
        %s285 = scalar_lea.vmem [#allocation2], %s284
        // Predicated region
        $region37: #{tpu_custom_call.1} parent=35 // pred_check
          %p286 = pneg %p90
        $region38: #{tpu_custom_call.1} parent=35 // pred_check_branch
          %288 = sbr.rel (%p286) target = $region40
        $region39: #{tpu_custom_call.1} parent=35 // pred_region
          %289 = dma.done %s282, 128
        $region40: #{tpu_custom_call.1} parent=35 // pred_fallthru
          _
        %s290 = sand.u32 %s105, 1
        %s291 = scalar_lea.sflag [#allocation6], %s290
        %s292 = sand.u32 %s105, 1
        %s293 = smul.addr %s292, 8
        %s294 = scalar_lea.vmem [#allocation5], %s293
        // Predicated region
        $region41: #{tpu_custom_call.1} parent=35 // pred_check
          %p295 = pneg %p118
        $region42: #{tpu_custom_call.1} parent=35 // pred_check_branch
          %297 = sbr.rel (%p295) target = $region44
        $region43: #{tpu_custom_call.1} parent=35 // pred_region
          %298 = dma.done %s291, 128
        $region44: #{tpu_custom_call.1} parent=35 // pred_fallthru
          _
        %p299 = scmp.lt.s32.totalorder %s33, 1
        %s300 = scalar_select %p299, %s33, 1
        %s301 = smul.addr %s300, 8
        %s302 = scalar_lea.vmem %s0, %s301
        %p303 = pneg %p62
        %p304 = pneg %p59
        %s305 = sand.u32 %s77, 1
        %s306 = scalar_lea.sflag [#allocation3], %s305
        %s307 = sand.u32 %s77, 1
        %s308 = smul.addr %s307, 8
        %s309 = scalar_lea.vmem [#allocation2], %s308
        %p310 = pneg %p90
        %p311 = pneg %p87
        %s312 = sand.u32 %s105, 1
        %s313 = scalar_lea.sflag [#allocation6], %s312
        %s314 = sand.u32 %s105, 1
        %s315 = smul.addr %s314, 8
        %s316 = scalar_lea.vmem [#allocation5], %s315
        %p317 = pneg %p118
        %p318 = pneg %p115
        %p319 = scmp.lt.s32.totalorder %s33, 1
        %s320 = scalar_select %p319, %s33, 1
        %p321 = scmp.lt.s32.totalorder %s34, 0
        %s322 = scalar_select %p321, %s34, 0
        %s323 = sadd.s32 %s322, %s320
        %s324 = smul.addr %s323, 8
        %s325 = scalar_lea.vmem %s3, %s324
        %p326 = pneg %p146
        %p327 = pneg %p143
        %p328 = pneg %p172
        %p329 = pneg %p169
        %s330 = sand.u32 %s159, 1
        %s331 = scalar_lea.sflag [#allocation4], %s330
        %s332 = sand.u32 %s159, 1
        %s333 = smul.addr %s332, 8
        %s334 = scalar_lea.vmem [#allocation7], %s333
        %p335 = pneg %p200
        %p336 = pneg %p197
        %s337 = sand.u32 %s187, 1
        %s338 = scalar_lea.sflag [#allocation9], %s337
        %s339 = sand.u32 %s187, 1
        %s340 = smul.addr %s339, 8
        %s341 = scalar_lea.vmem [#allocation8], %s340
        %p342 = scmp.lt.s32.totalorder %s33, 1
        %s343 = scalar_select %p342, %s33, 1
        %s344 = smul.addr %s343, 8
        %s345 = scalar_lea.vmem %s0, %s344
        %p346 = scmp.lt.s32.totalorder %s33, 1
        %s347 = scalar_select %p346, %s33, 1
        %p348 = scmp.lt.s32.totalorder %s34, 0
        %s349 = scalar_select %p348, %s34, 0
        %s350 = sadd.s32 %s349, %s347
        %s351 = smul.addr %s350, 8
        %s352 = scalar_lea.vmem %s3, %s351
        %v353 = vld [vmem:[%s345] sm:$0xff]
        %v354 = vld [vmem:[%s285] sm:$0xff]
        %v355 = vld [vmem:[%s294] sm:$0xff]
        %v356 = vld [vmem:[%s352] sm:$0xff]
        %vm357 = vcmp.ne.s32.totalorder %v356, 0
        %vm358 = vcmask 261120
        %v360 = vsel %vm358, %v353, 0
        %v363 = vsel %vm358, %v354, 0
        %365 = vmatprep.subr.mxu0 0.0
        %366 = vmatpush1.xpose.msra.mxu0 %v363
        %367 = vmatprep.subr.mxu0 0.0
        %368 = vmatpush1.xpose.msra.mxu0 0.0
        %369 = vmatprep.subr.mxu0 0.0
        %370 = vmatpush1.xpose.msra.mxu0 0.0
        %371 = vmatprep.subr.mxu0 0.0
        %372 = vmatpush1.xpose.msra.mxu0 0.0
        %373 = vmatprep.subr.mxu0 0.0
        %374 = vmatpush1.xpose.msra.mxu0 0.0
        %375 = vmatprep.subr.mxu0 0.0
        %376 = vmatpush1.xpose.msra.mxu0 0.0
        %377 = vmatprep.subr.mxu0 0.0
        %378 = vmatpush1.xpose.msra.mxu0 0.0
        %379 = vmatprep.subr.mxu0 0.0
        %380 = vmatpush1.xpose.msra.mxu0 0.0
        %381 = vmatprep.subr.mxu0 0.0
        %382 = vmatpush1.xpose.msra.mxu0 0.0
        %383 = vmatprep.subr.mxu0 0.0
        %384 = vmatpush1.xpose.msra.mxu0 0.0
        %385 = vmatprep.subr.mxu0 0.0
        %386 = vmatpush1.xpose.msra.mxu0 0.0
        %387 = vmatprep.subr.mxu0 0.0
        %388 = vmatpush1.xpose.msra.mxu0 0.0
        %389 = vmatprep.subr.mxu0 0.0
        %390 = vmatpush1.xpose.msra.mxu0 0.0
        %391 = vmatprep.subr.mxu0 0.0
        %392 = vmatpush1.xpose.msra.mxu0 0.0
        %393 = vmatprep.subr.mxu0 0.0
        %394 = vmatpush1.xpose.msra.mxu0 0.0
        %395 = vmatprep.subr.mxu0 0.0
        %396 = vmatpush1.xpose.msra.mxu0 0.0
        %397 = vmatprep.subr.mxu0 0.0
        %398 = vmatpush1.xpose.msra.mxu0 0.0
        %399 = vmatprep.subr.mxu0 0.0
        %400 = vmatpush1.xpose.msra.mxu0 0.0
        %401 = vmatprep.subr.mxu0 0.0
        %402 = vmatpush1.xpose.msra.mxu0 0.0
        %403 = vmatprep.subr.mxu0 0.0
        %404 = vmatpush1.xpose.msra.mxu0 0.0
        %405 = vmatprep.subr.mxu0 0.0
        %406 = vmatpush1.xpose.msra.mxu0 0.0
        %407 = vmatprep.subr.mxu0 0.0
        %408 = vmatpush1.xpose.msra.mxu0 0.0
        %409 = vmatprep.subr.mxu0 0.0
        %410 = vmatpush1.xpose.msra.mxu0 0.0
        %411 = vmatprep.subr.mxu0 0.0
        %412 = vmatpush1.xpose.msra.mxu0 0.0
        %413 = vmatprep.subr.mxu0 0.0
        %414 = vmatpush1.xpose.msra.mxu0 0.0
        %415 = vmatprep.subr.mxu0 0.0
        %416 = vmatpush1.xpose.msra.mxu0 0.0
        %417 = vmatprep.subr.mxu0 0.0
        %418 = vmatpush1.xpose.msra.mxu0 0.0
        %419 = vmatprep.subr.mxu0 0.0
        %420 = vmatpush1.xpose.msra.mxu0 0.0
        %421 = vmatprep.subr.mxu0 0.0
        %422 = vmatpush1.xpose.msra.mxu0 0.0
        %423 = vmatprep.subr.mxu0 0.0
        %424 = vmatpush1.xpose.msra.mxu0 0.0
        %425 = vmatprep.subr.mxu0 0.0
        %426 = vmatpush1.xpose.msra.mxu0 0.0
        %427 = vmatprep.subr.mxu0 0.0
        %428 = vmatpush1.xpose.msra.mxu0 0.0
        %429 = vmatprep.mubr.f32.mxu0 0.0
        %430 = vmatmul.mubr.f32.gmra.mrb[0].mxu0 %v360
        %v431 = vpop.f32.mrb[0].mxu0
        %v432 = vadd.f32 0.0, %v431
        %v433 = vpop.f32.mrb[0].mxu0
        %434 = vdwg.mxu0
        %v435 = vmul.f32 %v432, 0.17677669
        %v436 = vsel %vm357, -1e+09, %v435
        %vm437 = vcmask 64512
        %v438 = vsel %vm437, %v436, -inf
        %v439 = vrot.slane %v438, 4
        %v440 = vmax.f32 %v438, %v439
        %v441 = vrot.slane %v440, 2
        %v442 = vmax.f32 %v440, %v441
        %v443 = vrot.slane %v442, 1
        %v444 = vmax.f32 %v442, %v443
        %v445 = vsub.f32 %v436, %v444
        %v446 = vmul.f32 %v445, 1.442695
        %v447 = vpow.pop %v446
        %v448 = vsel %vm437, %v447, 0.0
        %v449 = vrot.slane %v448, 4
        %v450 = vadd.f32 %v448, %v449
        %v451 = vrot.slane %v450, 2
        %v452 = vadd.f32 %v450, %v451
        %v453 = vrot.slane %v452, 1
        %v454 = vadd.f32 %v452, %v453
        %v455 = vrcp.pop %v454
        %v456 = vmul.f32 %v447, %v455
        %v458 = vsel %vm437, %v456, 0
        %460 = vmatprep.subr.mxu0 0.0
        %461 = vmatpush1.msra.mxu0 %v355
        %462 = vmatprep.subr.mxu0 0.0
        %463 = vmatpush1.msra.mxu0 0.0
        %464 = vmatprep.subr.mxu0 0.0
        %465 = vmatpush1.msra.mxu0 0.0
        %466 = vmatprep.subr.mxu0 0.0
        %467 = vmatpush1.msra.mxu0 0.0
        %468 = vmatprep.subr.mxu0 0.0
        %469 = vmatpush1.msra.mxu0 0.0
        %470 = vmatprep.subr.mxu0 0.0
        %471 = vmatpush1.msra.mxu0 0.0
        %472 = vmatprep.subr.mxu0 0.0
        %473 = vmatpush1.msra.mxu0 0.0
        %474 = vmatprep.subr.mxu0 0.0
        %475 = vmatpush1.msra.mxu0 0.0
        %476 = vmatprep.subr.mxu0 0.0
        %477 = vmatpush1.msra.mxu0 0.0
        %478 = vmatprep.subr.mxu0 0.0
        %479 = vmatpush1.msra.mxu0 0.0
        %480 = vmatprep.subr.mxu0 0.0
        %481 = vmatpush1.msra.mxu0 0.0
        %482 = vmatprep.subr.mxu0 0.0
        %483 = vmatpush1.msra.mxu0 0.0
        %484 = vmatprep.subr.mxu0 0.0
        %485 = vmatpush1.msra.mxu0 0.0
        %486 = vmatprep.subr.mxu0 0.0
        %487 = vmatpush1.msra.mxu0 0.0
        %488 = vmatprep.subr.mxu0 0.0
        %489 = vmatpush1.msra.mxu0 0.0
        %490 = vmatprep.subr.mxu0 0.0
        %491 = vmatpush1.msra.mxu0 0.0
        %492 = vmatprep.subr.mxu0 0.0
        %493 = vmatpush1.msra.mxu0 0.0
        %494 = vmatprep.subr.mxu0 0.0
        %495 = vmatpush1.msra.mxu0 0.0
        %496 = vmatprep.subr.mxu0 0.0
        %497 = vmatpush1.msra.mxu0 0.0
        %498 = vmatprep.subr.mxu0 0.0
        %499 = vmatpush1.msra.mxu0 0.0
        %500 = vmatprep.subr.mxu0 0.0
        %501 = vmatpush1.msra.mxu0 0.0
        %502 = vmatprep.subr.mxu0 0.0
        %503 = vmatpush1.msra.mxu0 0.0
        %504 = vmatprep.subr.mxu0 0.0
        %505 = vmatpush1.msra.mxu0 0.0
        %506 = vmatprep.subr.mxu0 0.0
        %507 = vmatpush1.msra.mxu0 0.0
        %508 = vmatprep.subr.mxu0 0.0
        %509 = vmatpush1.msra.mxu0 0.0
        %510 = vmatprep.subr.mxu0 0.0
        %511 = vmatpush1.msra.mxu0 0.0
        %512 = vmatprep.subr.mxu0 0.0
        %513 = vmatpush1.msra.mxu0 0.0
        %514 = vmatprep.subr.mxu0 0.0
        %515 = vmatpush1.msra.mxu0 0.0
        %516 = vmatprep.subr.mxu0 0.0
        %517 = vmatpush1.msra.mxu0 0.0
        %518 = vmatprep.subr.mxu0 0.0
        %519 = vmatpush1.msra.mxu0 0.0
        %520 = vmatprep.subr.mxu0 0.0
        %521 = vmatpush1.msra.mxu0 0.0
        %522 = vmatprep.subr.mxu0 0.0
        %523 = vmatpush1.msra.mxu0 0.0
        %524 = vmatprep.mubr.f32.mxu0 0.0
        %525 = vmatmul.mubr.f32.gmra.mrb[0].mxu0 %v458
        %v526 = vpop.f32.mrb[0].mxu0
        %v527 = vadd.f32 0.0, %v526
        %v528 = vpop.f32.mrb[0].mxu0
        %529 = vdwg.mxu0
        %530 = vst.msk [vmem:[%s341] sm:$0xff] %vm437, %v456
        %p531 = scmp.eq.s32.totalorder %s34, 0
        // Predicated region
        $region45: #{tpu_custom_call.1} parent=35 // pred_check
          %p532 = pneg %p531
        $region46: #{tpu_custom_call.1} parent=35 // pred_check_branch
          %534 = sbr.rel (%p532) target = $region48
        $region47: #{tpu_custom_call.1} parent=35 // pred_region
          %535 = vst.msk [vmem:[%s334] sm:$0xff] %vm358, %v527
        $region48: #{tpu_custom_call.1} parent=35 // pred_fallthru
          _
        %p536 = scmp.gt.s32.totalorder %s34, 0
        // Predicated region
        $region49: #{tpu_custom_call.1} parent=35 // pred_check
          %p537 = pneg %p536
        $region50: #{tpu_custom_call.1} parent=35 // pred_check_branch
          %539 = sbr.rel (%p537) target = $region52
        $region51: #{tpu_custom_call.1} parent=35 // pred_region
          %v540 = vld [vmem:[%s334] sm:$0xff]
          %v541 = vadd.f32 %v540, %v527
          %542 = vst.msk [vmem:[%s334] sm:$0xff] %vm358, %v541
        $region52: #{tpu_custom_call.1} parent=35 // pred_fallthru
          _
        %s543 = sand.u32 %s159, 1
        %s544 = scalar_lea.sflag [#allocation4], %s543
        %s545 = sand.u32 %s159, 1
        %s546 = smul.addr %s545, 8
        %s547 = scalar_lea.vmem [#allocation7], %s546
        %s548 = sand.u32 %s187, 1
        %s549 = scalar_lea.sflag [#allocation9], %s548
        %s550 = sand.u32 %s187, 1
        %s551 = smul.addr %s550, 8
        %s552 = scalar_lea.vmem [#allocation8], %s551
        // Predicated region
        $region53: #{tpu_custom_call.1} parent=35 // pred_check
          %p553 = pneg %p169
        $region54: #{tpu_custom_call.1} parent=35 // pred_check_branch
          %555 = sbr.rel (%p553) target = $region56
        $region55: #{tpu_custom_call.1} parent=35 // pred_region
          %s557 = ssub.s32 128, 128
          %558 = vsyncadd %s544, %s557
          %s559 = smul.addr %s33, 128
          %s560 = scalar_lea.hbm %s4, %s559
          %s562 = sshll.u32 %s547, 4
          %s563 = int_to_ptr.vmem [resolvable:$true] %s562
          %565 = dma.vmem_to_hbm [thread:$0]  %s563, 128, %s560, %s544
        $region56: #{tpu_custom_call.1} parent=35 // pred_fallthru
          _
        // Predicated region
        $region57: #{tpu_custom_call.1} parent=35 // pred_check
          %p566 = pneg %p197
        $region58: #{tpu_custom_call.1} parent=35 // pred_check_branch
          %568 = sbr.rel (%p566) target = $region60
        $region59: #{tpu_custom_call.1} parent=35 // pred_region
          %s570 = ssub.s32 128, 128
          %571 = vsyncadd %s549, %s570
          %s572 = sadd.s32 %s34, %s33
          %s573 = smul.addr %s572, 128
          %s574 = scalar_lea.hbm %s5, %s573
          %s576 = sshll.u32 %s552, 4
          %s577 = int_to_ptr.vmem [resolvable:$true] %s576
          %579 = dma.vmem_to_hbm [thread:$0]  %s577, 128, %s574, %s549
        $region60: #{tpu_custom_call.1} parent=35 // pred_fallthru
          _
      $region36: #{tpu_custom_call.1} parent=5 // pred_fallthru
        _
      %p580 = scmp.le.s32.totalorder 2, %s24
      // Predicated region
      $region61: #{tpu_custom_call.1} parent=5 // pred_check
        %p581 = pneg %p580
      $region62: #{tpu_custom_call.1} parent=5 // pred_check_branch
        %583 = sbr.rel (%p581) target = $region64
      $region63: #{tpu_custom_call.1} parent=5 // pred_region
        %s584 = ssub.s32 %s24, 2
        // Predicated region
        $region65: #{tpu_custom_call.1} parent=63 // pred_check
          %p585 = pneg %p175
        $region66: #{tpu_custom_call.1} parent=63 // pred_check_branch
          %587 = sbr.rel (%p585) target = $region68
        $region67: #{tpu_custom_call.1} parent=63 // pred_region
          %s588 = sand.u32 %s160, 1
          %s589 = scalar_lea.sflag [#allocation4], %s588
          %s590 = sand.u32 %s160, 1
          %s591 = smul.addr %s590, 8
          %s592 = scalar_lea.vmem [#allocation7], %s591
          %593 = dma.done %s589, 128
        $region68: #{tpu_custom_call.1} parent=63 // pred_fallthru
          _
        // Predicated region
        $region69: #{tpu_custom_call.1} parent=63 // pred_check
          %p594 = pneg %p203
        $region70: #{tpu_custom_call.1} parent=63 // pred_check_branch
          %596 = sbr.rel (%p594) target = $region72
        $region71: #{tpu_custom_call.1} parent=63 // pred_region
          %s597 = sand.u32 %s188, 1
          %s598 = scalar_lea.sflag [#allocation9], %s597
          %s599 = sand.u32 %s188, 1
          %s600 = smul.addr %s599, 8
          %s601 = scalar_lea.vmem [#allocation8], %s600
          %602 = dma.done %s598, 128
        $region72: #{tpu_custom_call.1} parent=63 // pred_fallthru
          _
      $region64: #{tpu_custom_call.1} parent=5 // pred_fallthru
        _
    $region6: #{tpu_custom_call.1} parent=1 // loop_footer
      %s28 = sadd.s32 1, %s24
    $region7: #{tpu_custom_call.1} parent=1 // loop_footer_branch
      %23 = sbr.rel target = $region3
    $region8: #{tpu_custom_call.1} parent=1 // loop_exit
      _
    %603 = vsyncpa [#allocation3], 1
    %s604 = scalar_lea.sflag [#allocation3], 1
    %605 = vsyncpa %s604, 1
    %606 = vsyncpa [#allocation6], 1
    %s607 = scalar_lea.sflag [#allocation6], 1
    %608 = vsyncpa %s607, 1
    %609 = vsyncpa [#allocation4], 1
    %s610 = scalar_lea.sflag [#allocation4], 1
    %611 = vsyncpa %s610, 1
    %612 = vsyncpa [#allocation9], 1
    %s613 = scalar_lea.sflag [#allocation9], 1
    %614 = vsyncpa %s613, 1

</llo_original>
